<compile_context>
chip_gen: v7x
topology: tpu7x:2x2x1
jax: 0.10.0
libtpu: 0.0.40
codegen_flags: <defaults>
</compile_context>

<pallas_src>
import functools

import jax
import jax.numpy as jnp
from jax.experimental import pallas as pl
from jax.experimental.pallas import tpu as pltpu


def _rmsnorm_kernel(x_ref, w_ref, o_ref, *, eps: float, torch_exact: bool):
    # x_ref: (tile_rows, hidden), w_ref: (1, hidden), o_ref: (tile_rows, hidden)
    x = x_ref[...].astype(jnp.float32)                 # hidden_states.to(float32)
    var = jnp.mean(x * x, axis=-1, keepdims=True)      # pow(2).mean(-1, keepdim=True)
    inv = jax.lax.rsqrt(var + eps)                     # rsqrt(variance + eps)
    y = x * inv
    if torch_exact and jnp.dtype(x_ref.dtype) != jnp.dtype(jnp.float32):
        # Bit-faithful to the PyTorch recipe: round-trip through the input
        # dtype before the weight multiply.  No-op (and no cost) for f32 input.
        y = y.astype(x_ref.dtype).astype(jnp.float32)
    o_ref[...] = (w_ref[...].astype(jnp.float32) * y).astype(o_ref.dtype)


def _round_up(x: int, m: int) -> int:
    return (x + m - 1) // m * m


def _rmsnorm_xla(x, weight, eps, torch_exact: bool = True):
    """Pure-JAX reference (also used as fallback for non-lane-dense hidden)."""
    xf = x.astype(jnp.float32)
    var = jnp.mean(xf * xf, axis=-1, keepdims=True)
    y = xf * jax.lax.rsqrt(var + eps)
    if torch_exact:
        y = y.astype(x.dtype)
    return weight * y


def rmsnorm(x: jax.Array, weight: jax.Array, eps: float = 1e-6,
            tile_rows: int | None = None, torch_exact: bool = True) -> jax.Array:
    """RMSNorm over the last axis of x (any leading shape)."""
    orig_shape = x.shape
    hidden = orig_shape[-1]
    rows = 1
    for d in orig_shape[:-1]:
        rows *= d

    # Non-lane-dense hidden (not a multiple of 128) would make every load and
    # store a masked partial op; the kernel would still be *correct* (block
    # last-dim == full array dim), but plain XLA is at least as good there, so
    # fall back.  All Qwen2 hidden sizes are multiples of 128.
    if rows == 0 or hidden % 128 != 0:
        return _rmsnorm_xla(x, weight, eps, torch_exact)

    x2 = x.reshape(rows, hidden)
    w2 = weight.reshape(1, hidden)

    # Output dtype follows torch promotion: weight * hidden_states.to(input_dtype).
    out_dtype = jnp.promote_types(weight.dtype, x.dtype)

    in_bytes = jnp.dtype(x.dtype).itemsize
    out_bytes = jnp.dtype(out_dtype).itemsize
    w_bytes = jnp.dtype(weight.dtype).itemsize
    # Sublane packing for BOTH sides (8 rows/vreg for 4-byte, 16 for bf16, ...)
    # so loads *and* stores use whole packed sublanes (unmasked vst).
    row_align = max(8, 32 // max(1, in_bytes), 32 // max(1, out_bytes))

    try:
        vmem_cap = int(pltpu.get_tpu_info().vmem_capacity_bytes)
    except Exception:  # pragma: no cover - defensive, e.g. interpret mode
        vmem_cap = 64 * 1024 * 1024  # v7x per-TensorCore capacity (smallest)

    # Live bytes per row inside a grid step: double-buffered in + out blocks
    # plus ~3 f32 temporaries (x_f32, x*x, dtype-round-trip y can all be live).
    per_row_bytes = hidden * (2 * in_bytes + 2 * out_bytes + 3 * 4)
    budget = min(vmem_cap // 3, 40 * 1024 * 1024)

    if tile_rows is None:
        fit = max(row_align,
                  (budget // max(per_row_bytes, 1)) // row_align * row_align)
        fit = min(fit, 512)  # ~85% of HBM roofline already; safe in v7x's 64 MiB
        # Aim for >= 8 (even) grid steps: keeps prefetch/compute/writeback
        # overlapped and shards evenly across v7x's two TensorCores.
        target_steps = max(8, pl.cdiv(rows, fit))
        if target_steps % 2:
            target_steps += 1
        tile_rows = min(fit, _round_up(pl.cdiv(rows, target_steps), row_align))
    tile_rows = max(row_align, (tile_rows // row_align) * row_align)
    tile_rows = min(tile_rows, _round_up(rows, row_align))

    grid_n = pl.cdiv(rows, tile_rows)
    # Nudge an odd grid toward an even one (an odd grid leaves a 2:1 imbalance
    # across v7x's two TensorCores); alt <= tile_rows so it stays in budget.
    if grid_n > 1 and grid_n % 2 == 1:
        alt = _round_up(pl.cdiv(rows, grid_n + 1), row_align)
        if alt >= row_align and pl.cdiv(rows, alt) % 2 == 0:
            tile_rows = alt
            grid_n = pl.cdiv(rows, alt)

    # Deeper input buffering only pays when the per-step DMA is small.
    block_in_bytes = tile_rows * hidden * in_bytes
    in_buffers = 3 if (block_in_bytes < (1 << 20) and grid_n > 2) else 2

    footprint = (tile_rows * hidden * (in_buffers * in_bytes + 2 * out_bytes + 3 * 4)
                 + hidden * (2 * w_bytes + 4))
    vmem_limit = int(min(vmem_cap - (8 << 20),
                         max(32 << 20, footprint + (8 << 20))))

    kernel = functools.partial(_rmsnorm_kernel, eps=eps, torch_exact=torch_exact)

    def build(nbuf):
        if nbuf == 2:
            x_spec = pl.BlockSpec((tile_rows, hidden), lambda i: (i, 0))
        else:
            x_spec = pl.BlockSpec((tile_rows, hidden), lambda i: (i, 0),
                                  pipeline_mode=pl.Buffered(nbuf))
        return pl.pallas_call(
            kernel,
            out_shape=jax.ShapeDtypeStruct((rows, hidden), out_dtype),
            grid_spec=pltpu.PrefetchScalarGridSpec(
                num_scalar_prefetch=0,
                grid=(grid_n,),
                in_specs=[
                    x_spec,
                    pl.BlockSpec((1, hidden), lambda i: (0, 0)),
                ],
                out_specs=pl.BlockSpec((tile_rows, hidden), lambda i: (i, 0)),
            ),
            compiler_params=pltpu.CompilerParams(
                # "parallel" shards the row grid across both TensorCores on
                # v7x; neutral on single-TC v5e/v6e.
                dimension_semantics=("parallel",),
                vmem_limit_bytes=vmem_limit,
            ),
        )

    try:
        out = build(in_buffers)(x2, w2)
    except Exception:
        if in_buffers == 2:
            raise
        # Conservative retry without the deeper input buffer.
        out = build(2)(x2, w2)

    return out.reshape(orig_shape[:-1] + (hidden,))


if __name__ == "__main__":
    batch, seq, hidden = 2, 8, 256
    eps = 1e-6

    key = jax.random.PRNGKey(0)
    x = jax.random.normal(key, (batch, seq, hidden), dtype=jnp.float32)

    # Deterministic parameter init: nn.Parameter(torch.ones(hidden_size))
    weight = jnp.ones((hidden,), dtype=jnp.float32)

    out = jax.block_until_ready(rmsnorm(x, weight, eps=eps))
    ref = _rmsnorm_xla(x, weight, eps)
    assert out.shape == (batch, seq, hidden)
    assert out.dtype == ref.dtype
    assert jnp.allclose(out, ref, atol=1e-5, rtol=1e-5), "mismatch vs reference"

    # Row count that is NOT a multiple of the tile: exercises the clipped
    # trailing block (no wrapper-side pad/slice HBM round-trip).
    x_odd = jax.random.normal(jax.random.PRNGKey(1), (3, 7, hidden), dtype=jnp.float32)
    out_odd = jax.block_until_ready(rmsnorm(x_odd, weight, eps=eps))
    assert jnp.allclose(out_odd, _rmsnorm_xla(x_odd, weight, eps),
                        atol=1e-5, rtol=1e-5)

    # bf16 activations with f32 weight (typical Qwen2 serving mix); the
    # torch-exact dtype round-trip makes this match the PyTorch recipe.
    x_bf = jax.random.normal(jax.random.PRNGKey(2), (2, 8, hidden),
                             dtype=jnp.float32).astype(jnp.bfloat16)
    out_bf = jax.block_until_ready(rmsnorm(x_bf, weight, eps=eps))
    ref_bf = _rmsnorm_xla(x_bf, weight, eps)
    assert out_bf.dtype == ref_bf.dtype
    assert jnp.allclose(out_bf, ref_bf, atol=2e-2, rtol=2e-2)

    print("KERNEL_OK")
</pallas_src>

<mosaic_0001>
module attributes {stable_mosaic.version = 11 : i64} {
  func.func @_rmsnorm_kernel(%arg0: i32, %arg1: memref<8x256xf32, #tpu.memory_space<vmem>>, %arg2: memref<1x256xf32, #tpu.memory_space<vmem>>, %arg3: memref<8x256xf32, #tpu.memory_space<vmem>>) attributes {dimension_semantics = [#tpu.dimension_semantics<parallel>], iteration_bounds = array<i64: 2>, scalar_prefetch = 0 : i64, scratch_operands = 0 : i64, tpu.core_type = #tpu.core_type<tc>, window_params = [{transform_indices = @transform_0, window_bounds = array<i64: 8, 256>}, {pipeline_mode = #tpu.pipeline_mode<synchronous>, transform_indices = @transform_1, window_bounds = array<i64: 1, 256>}, {transform_indices = @transform_2, window_bounds = array<i64: 8, 256>}]} {
    %c0 = arith.constant 0 : index
    %c0_0 = arith.constant 0 : index
    %0 = vector.load %arg1[%c0, %c0_0] : memref<8x256xf32, #tpu.memory_space<vmem>>, vector<8x256xf32>
    %1 = arith.mulf %0, %0 : vector<8x256xf32>
    %cst = arith.constant dense<0.000000e+00> : vector<8xf32>
    %2 = vector.multi_reduction <add>, %1, %cst [1] : vector<8x256xf32> to vector<8xf32>
    %3 = vector.shape_cast %2 : vector<8xf32> to vector<8x1xf32>
    %cst_1 = arith.constant 2.560000e+02 : f32
    %4 = vector.broadcast %cst_1 : f32 to vector<8x1xf32>
    %5 = arith.divf %3, %4 : vector<8x1xf32>
    %cst_2 = arith.constant 9.99999997E-7 : f32
    %6 = vector.broadcast %cst_2 : f32 to vector<8x1xf32>
    %7 = arith.addf %5, %6 : vector<8x1xf32>
    %8 = math.rsqrt %7 : vector<8x1xf32>
    %9 = vector.broadcast %8 : vector<8x1xf32> to vector<8x256xf32>
    %10 = arith.mulf %0, %9 : vector<8x256xf32>
    %c0_3 = arith.constant 0 : index
    %c0_4 = arith.constant 0 : index
    %11 = vector.load %arg2[%c0_3, %c0_4] : memref<1x256xf32, #tpu.memory_space<vmem>>, vector<1x256xf32>
    %12 = vector.broadcast %11 : vector<1x256xf32> to vector<8x256xf32>
    %13 = arith.mulf %12, %10 : vector<8x256xf32>
    %c0_5 = arith.constant 0 : index
    %c0_6 = arith.constant 0 : index
    %14 = vector.load %arg3[%c0_5, %c0_6] : memref<8x256xf32, #tpu.memory_space<vmem>>, vector<8x256xf32>
    tpu.vector_store %arg3[%c0_5, %c0_6], %13 {strides = array<i32>} : memref<8x256xf32, #tpu.memory_space<vmem>>, vector<8x256xf32>,
    return
  }
  func.func @transform_0(%arg0: i32) -> (i32, i32) {
    %c0_i32 = arith.constant 0 : i32
    %c0_i32_0 = arith.constant 0 : i32
    return %arg0, %c0_i32 : i32, i32
  }
  func.func @transform_1(%arg0: i32) -> (i32, i32) {
    %c0_i32 = arith.constant 0 : i32
    %c0_i32_0 = arith.constant 0 : i32
    %c0_i32_1 = arith.constant 0 : i32
    return %c0_i32, %c0_i32_0 : i32, i32
  }
  func.func @transform_2(%arg0: i32) -> (i32, i32) {
    %c0_i32 = arith.constant 0 : i32
    %c0_i32_0 = arith.constant 0 : i32
    return %arg0, %c0_i32 : i32, i32
  }
}

</mosaic_0001>

<llo_original>
// kernel: tpu_custom_call.1
$region0: #{tpu_custom_call.1}
  #allocation0 [shape = 'u32[]', space=smem, size = 0x4, offset = 0x4, fixed_abs, tag = 'smem constant byte address 0x4 - core index']
  #allocation1 [shape = 'u32[144,128]{1,0:T(1,128)}', space=vmem, size = 0x12000, scoped, tag = 'internal scratch']
  %s0 = inlined_call_operand.hbm [shape: f32[16,256], index: 0, kind: input, shape index: {}]
  %s1 = inlined_call_operand.vmem [shape: f32[1,256], index: 1, kind: input, shape index: {}]
  %s2 = inlined_call_operand.hbm [shape: f32[16,256], index: 2, kind: output, shape index: {}]
  %s3 = sld [smem:[#allocation0]]
  $region45: #{tpu_custom_call.1} parent=0
    _
  %s5 = ssub.s32 1, %s3
  %s6 = scalar_select 0, %s5, %s3
  $region1: #{tpu_custom_call.1} parent=0
    #allocation2 [shape = 'u8[16384]{0}', space=vmem, size = 0x4000, scoped, tag = 'input window, operand 0']
    #allocation3 [shape = 's32[2]{0}', space=sflag, size = 0x8, scoped, tag = 'scoped memory for tpu_custom_call.1']
    #allocation4 [shape = 's32[2]{0}', space=sflag, size = 0x8, scoped, tag = 'scoped memory for tpu_custom_call.1']
    #allocation5 [shape = 'u8[16384]{0}', space=vmem, size = 0x4000, scoped, tag = 'output window, operand 0']
    %7 = vsyncpa [#allocation3], 0
    %s8 = scalar_lea.sflag [#allocation3], 1
    %9 = vsyncpa %s8, 0
    %10 = vsyncpa [#allocation4], 0
    %s11 = scalar_lea.sflag [#allocation4], 1
    %12 = vsyncpa %s11, 0
    loop: start=0, step=1, limit=4
    $region2: #{tpu_custom_call.1} parent=1 // loop_pre_header
      _
    $region3: #{tpu_custom_call.1} parent=1 // loop_header
      %s14 = sphi 0, %s18
      %p15 = scmp.ge.s32.totalorder %s14, 4
      %s24 = sphi 0, %s26
      %s27 = sphi 0, %s24
      %s28 = sphi 0, %s27
      %s44 = sphi 0, %s28
      %s48 = sphi 0, %s48
      %s50 = sphi 0, %s48
      %s51 = sphi 0, %s50
      %s65 = sphi 0, %s51
      %s71 = sphi 0, %s73
      %s74 = sphi 0, %s71
      %s75 = sphi 0, %s74
      %s91 = sphi 0, %s75
    $region4: #{tpu_custom_call.1} parent=1 // loop_header_branch
      %17 = sbr.rel (%p15) target = $region8
    $region5: #{tpu_custom_call.1} parent=1 // loop_body
      %s19 = ssub.s32 %s14, 1
      %s20 = ssub.s32 %s14, 2
      %s21 = sadd.s32 %s14, 1
      %s22 = ssub.s32 %s14, %s21
      %p23 = scmp.eq.s32.totalorder %s22, 0
      %s25 = sadd.s32 %s24, 1
      %s26 = scalar_select %p23, %s24, %s25
      %p29 = pneg %p23
      %p30 = scmp.eq.s32.totalorder %s14, 1
      %p31 = por %p29, %p30
      %p32 = scmp.ne.s32.totalorder %s24, %s27
      %p33 = scmp.eq.s32.totalorder %s14, 0
      %p34 = por %p32, %p33
      %p35 = scmp.ne.s32.totalorder %s24, %s27
      %p36 = scmp.eq.s32.totalorder %s19, 1
      %p37 = por %p35, %p36
      %p38 = scmp.ne.s32.totalorder %s27, %s28
      %p39 = scmp.eq.s32.totalorder %s19, 0
      %p40 = por %p38, %p39
      %p41 = scmp.ne.s32.totalorder %s27, %s28
      %p42 = scmp.eq.s32.totalorder %s20, 1
      %p43 = por %p41, %p42
      %p45 = scmp.ne.s32.totalorder %s28, %s44
      %p46 = scmp.eq.s32.totalorder %s20, 0
      %p47 = por %p45, %p46
      %s49 = sadd.s32 %s48, 1
      %p52 = scmp.eq.s32.totalorder %s14, 1
      %p53 = scmp.ne.s32.totalorder %s48, %s50
      %p54 = scmp.eq.s32.totalorder %s14, 0
      %p55 = por %p53, %p54
      %p56 = scmp.ne.s32.totalorder %s48, %s50
      %p57 = scmp.eq.s32.totalorder %s19, 1
      %p58 = por %p56, %p57
      %p59 = scmp.ne.s32.totalorder %s50, %s51
      %p60 = scmp.eq.s32.totalorder %s19, 0
      %p61 = por %p59, %p60
      %p62 = scmp.ne.s32.totalorder %s50, %s51
      %p63 = scmp.eq.s32.totalorder %s20, 1
      %p64 = por %p62, %p63
      %p66 = scmp.ne.s32.totalorder %s51, %s65
      %p67 = scmp.eq.s32.totalorder %s20, 0
      %p68 = por %p66, %p67
      %s69 = ssub.s32 %s14, %s21
      %p70 = scmp.eq.s32.totalorder %s69, 0
      %s72 = sadd.s32 %s71, 1
      %s73 = scalar_select %p70, %s71, %s72
      %p76 = pneg %p70
      %p77 = scmp.eq.s32.totalorder %s14, 1
      %p78 = por %p76, %p77
      %p79 = scmp.ne.s32.totalorder %s71, %s74
      %p80 = scmp.eq.s32.totalorder %s14, 0
      %p81 = por %p79, %p80
      %p82 = scmp.ne.s32.totalorder %s71, %s74
      %p83 = scmp.eq.s32.totalorder %s19, 1
      %p84 = por %p82, %p83
      %p85 = scmp.ne.s32.totalorder %s74, %s75
      %p86 = scmp.eq.s32.totalorder %s19, 0
      %p87 = por %p85, %p86
      %p88 = scmp.ne.s32.totalorder %s74, %s75
      %p89 = scmp.eq.s32.totalorder %s20, 1
      %p90 = por %p88, %p89
      %p92 = scmp.ne.s32.totalorder %s75, %s91
      %p93 = scmp.eq.s32.totalorder %s20, 0
      %p94 = por %p92, %p93
      %p95 = scmp.le.s32.totalorder 1, %s14
      %p96 = scmp.lt.s32.totalorder %s14, 3
      %p97 = pnand %p95, %p96
      %p98 = pneg %p97
      // Predicated region
      $region9: #{tpu_custom_call.1} parent=5 // pred_check
        _
      $region10: #{tpu_custom_call.1} parent=5 // pred_check_branch
        %100 = sbr.rel (%p97) target = $region12
      $region11: #{tpu_custom_call.1} parent=5 // pred_region
        %s101 = ssub.s32 %s14, 1
        // Predicated region
        $region13: #{tpu_custom_call.1} parent=11 // pred_check
          %p102 = pneg %p61
        $region14: #{tpu_custom_call.1} parent=11 // pred_check_branch
          %104 = sbr.rel (%p102) target = $region16
        $region15: #{tpu_custom_call.1} parent=11 // pred_region
          _
        $region16: #{tpu_custom_call.1} parent=11 // pred_fallthru
          _
      $region12: #{tpu_custom_call.1} parent=5 // pred_fallthru
        _
      %p105 = scmp.lt.s32.totalorder %s14, 2
      // Predicated region
      $region17: #{tpu_custom_call.1} parent=5 // pred_check
        %p106 = pneg %p105
      $region18: #{tpu_custom_call.1} parent=5 // pred_check_branch
        %108 = sbr.rel (%p106) target = $region20
      $region19: #{tpu_custom_call.1} parent=5 // pred_region
        // Predicated region
        $region21: #{tpu_custom_call.1} parent=19 // pred_check
          %p109 = pneg %p34
        $region22: #{tpu_custom_call.1} parent=19 // pred_check_branch
          %111 = sbr.rel (%p109) target = $region24
        $region23: #{tpu_custom_call.1} parent=19 // pred_region
          %s112 = sand.u32 %s24, 1
          %s113 = scalar_lea.sflag [#allocation3], %s112
          %s114 = sand.u32 %s24, 1
          %s115 = smul.addr %s114, 16
          %s116 = scalar_lea.vmem [#allocation2], %s115
          %s118 = ssub.s32 256, 256
          %119 = vsyncadd %s113, %s118
          %s120 = smul.addr %s14, 2
          %s121 = smul.addr %s120, 128
          %s122 = scalar_lea.hbm %s0, %s121
          %s124 = sshll.u32 %s116, 4
          %s125 = int_to_ptr.vmem [resolvable:$true] %s124
          %127 = dma.hbm_to_vmem [thread:$0]  %s122, 256, %s125, %s113
        $region24: #{tpu_custom_call.1} parent=19 // pred_fallthru
          _
      $region20: #{tpu_custom_call.1} parent=5 // pred_fallthru
        _
      %p128 = scmp.le.s32.totalorder 1, %s14
      %p129 = scmp.lt.s32.totalorder %s14, 3
      %p130 = pnand %p128, %p129
      %p131 = pneg %p130
      // Predicated region
      $region25: #{tpu_custom_call.1} parent=5 // pred_check
        _
      $region26: #{tpu_custom_call.1} parent=5 // pred_check_branch
        %133 = sbr.rel (%p130) target = $region28
      $region27: #{tpu_custom_call.1} parent=5 // pred_region
        %s134 = ssub.s32 %s14, 1
        %s135 = sand.u32 %s27, 1
        %s136 = scalar_lea.sflag [#allocation3], %s135
        %s137 = sand.u32 %s27, 1
        %s138 = smul.addr %s137, 16
        %s139 = scalar_lea.vmem [#allocation2], %s138
        // Predicated region
        $region29: #{tpu_custom_call.1} parent=27 // pred_check
          %p140 = pneg %p40
        $region30: #{tpu_custom_call.1} parent=27 // pred_check_branch
          %142 = sbr.rel (%p140) target = $region32
        $region31: #{tpu_custom_call.1} parent=27 // pred_region
          %143 = dma.done %s136, 256
        $region32: #{tpu_custom_call.1} parent=27 // pred_fallthru
          _
        %s144 = sand.u32 %s27, 1
        %s145 = scalar_lea.sflag [#allocation3], %s144
        %s146 = sand.u32 %s27, 1
        %s147 = smul.addr %s146, 16
        %s148 = scalar_lea.vmem [#allocation2], %s147
        %p149 = pneg %p40
        %p150 = pneg %p37
        %p151 = pneg %p61
        %p152 = pneg %p58
        %p153 = pneg %p87
        %p154 = pneg %p84
        %s155 = sand.u32 %s74, 1
        %s156 = scalar_lea.sflag [#allocation4], %s155
        %s157 = sand.u32 %s74, 1
        %s158 = smul.addr %s157, 16
        %s159 = scalar_lea.vmem [#allocation5], %s158
        %v160 = vld [vmem:[%s139] sm:$0xff]
        %v161 = vld [vmem:[%s139 + $0x8] sm:$0xff]
        %v162 = vmul.f32 %v160, %v160
        %v163 = vmul.f32 %v161, %v161
        %v164 = vadd.f32 %v162, %v163
        %165 = vadd.xlane.f32.xlu0 %v164
        %v166 = vpop.xlane.xlu0 %165
        %v167 = vrcp.pop 256.0
        %v168 = vmul.f32 %v166, %v167
        %v169 = vadd.f32 %v168, 1e-06
        %v170 = vrsqrt.pop %v169
        %v171 = vmul.f32 %v160, %v170
        %v172 = vmul.f32 %v161, %v170
        %v173 = vld [vmem:[%s1] sm:$0x3]
        %v175 = vlaneseq
        %v176 = vshrl.u32 %v175, 7
        %v177 = vsub.s32 0, %v176
        %v178 = vrot.slane %v173, %v177
        %v179 = vlaneseq
        %v180 = vshrl.u32 %v179, 7
        %v181 = vsub.s32 1, %v180
        %v182 = vrot.slane %v173, %v181
        %v185 = vmul.f32 %v178, %v171
        %v186 = vmul.f32 %v182, %v172
        %187 = vst [vmem:[%s159] sm:$0xff] %v185
        %188 = vst [vmem:[%s159 + $0x8] sm:$0xff] %v186
        %s189 = sand.u32 %s74, 1
        %s190 = scalar_lea.sflag [#allocation4], %s189
        %s191 = sand.u32 %s74, 1
        %s192 = smul.addr %s191, 16
        %s193 = scalar_lea.vmem [#allocation5], %s192
        // Predicated region
        $region33: #{tpu_custom_call.1} parent=27 // pred_check
          %p194 = pneg %p84
        $region34: #{tpu_custom_call.1} parent=27 // pred_check_branch
          %196 = sbr.rel (%p194) target = $region36
        $region35: #{tpu_custom_call.1} parent=27 // pred_region
          %s198 = ssub.s32 256, 256
          %199 = vsyncadd %s190, %s198
          %s200 = smul.addr %s19, 2
          %s201 = smul.addr %s200, 128
          %s202 = scalar_lea.hbm %s2, %s201
          %s204 = sshll.u32 %s193, 4
          %s205 = int_to_ptr.vmem [resolvable:$true] %s204
          %207 = dma.vmem_to_hbm [thread:$0]  %s205, 256, %s202, %s190
        $region36: #{tpu_custom_call.1} parent=27 // pred_fallthru
          _
      $region28: #{tpu_custom_call.1} parent=5 // pred_fallthru
        _
      %p208 = scmp.le.s32.totalorder 2, %s14
      // Predicated region
      $region37: #{tpu_custom_call.1} parent=5 // pred_check
        %p209 = pneg %p208
      $region38: #{tpu_custom_call.1} parent=5 // pred_check_branch
        %211 = sbr.rel (%p209) target = $region40
      $region39: #{tpu_custom_call.1} parent=5 // pred_region
        %s212 = ssub.s32 %s14, 2
        // Predicated region
        $region41: #{tpu_custom_call.1} parent=39 // pred_check
          %p213 = pneg %p90
        $region42: #{tpu_custom_call.1} parent=39 // pred_check_branch
          %215 = sbr.rel (%p213) target = $region44
        $region43: #{tpu_custom_call.1} parent=39 // pred_region
          %s216 = sand.u32 %s75, 1
          %s217 = scalar_lea.sflag [#allocation4], %s216
          %s218 = sand.u32 %s75, 1
          %s219 = smul.addr %s218, 16
          %s220 = scalar_lea.vmem [#allocation5], %s219
          %221 = dma.done %s217, 256
        $region44: #{tpu_custom_call.1} parent=39 // pred_fallthru
          _
      $region40: #{tpu_custom_call.1} parent=5 // pred_fallthru
        _
    $region6: #{tpu_custom_call.1} parent=1 // loop_footer
      %s18 = sadd.s32 1, %s14
    $region7: #{tpu_custom_call.1} parent=1 // loop_footer_branch
      %13 = sbr.rel target = $region3
    $region8: #{tpu_custom_call.1} parent=1 // loop_exit
      _
    %222 = vsyncpa [#allocation3], 1
    %s223 = scalar_lea.sflag [#allocation3], 1
    %224 = vsyncpa %s223, 1
    %225 = vsyncpa [#allocation4], 1
    %s226 = scalar_lea.sflag [#allocation4], 1
    %227 = vsyncpa %s226, 1

</llo_original>
